<compile_context>
chip_gen: v7x
topology: tpu7x:2x2x1
jax: 0.10.0
libtpu: 0.0.40
codegen_flags: <defaults>
</compile_context>

<pallas_src>
import jax
import jax.numpy as jnp
from jax.experimental import pallas as pl
from jax.experimental.pallas import tpu as pltpu


LANE_WIDTH = 1024         # lane-dense last dim (multiple of 128) -> unmasked vst
TARGET_BLOCK_ROWS = 512   # 512 x 1024 x 4 B = 2 MiB per f32 buffer
MIN_TILE_ELEMS = 8 * 128  # one (8, 128) f32 tile = minimum pad granularity


def _expnegmod_kernel(x_ref, o_ref):
    x = x_ref[...]
    # Compute in f32 (v5e VPU/EUP have no bf16 path); cast back once per block.
    y = jnp.exp(-jnp.abs(x.astype(jnp.float32)))
    o_ref[...] = y.astype(o_ref.dtype)


def expnegmod(x):
    """Elementwise exp(-abs(x)), computed in a Pallas TPU kernel."""
    orig_shape = x.shape
    orig_dtype = x.dtype

    flat = x.reshape(-1)
    n = flat.shape[0]

    # Pad only up to a single (8,128) tile worth of elements, and only when
    # needed -- jnp.pad and the trailing slice are extra HBM passes for a
    # bandwidth-bound op, so skip them in the common exactly-divisible case.
    n_pad = pl.cdiv(n, MIN_TILE_ELEMS) * MIN_TILE_ELEMS
    padded = n_pad != n
    if padded:
        # exp(-|0|) = 1 in the (discarded) padding region: no traps, no NaNs.
        flat = jnp.pad(flat, (0, n_pad - n))

    # n_pad is a multiple of 1024 == LANE_WIDTH, so this reshape is exact.
    rows = n_pad // LANE_WIDTH
    x2d = flat.reshape(rows, LANE_WIDTH)

    # Block rows: a multiple of 8 (sublane) capped at TARGET_BLOCK_ROWS; for
    # tiny inputs whose row count is not a multiple of 8, fall back to the
    # full row extent (block dim == full array dim is always legal).
    if rows % 8 == 0:
        block_rows = min(TARGET_BLOCK_ROWS, rows)
    else:
        block_rows = rows

    grid = (pl.cdiv(rows, block_rows),)

    out2d = pl.pallas_call(
        _expnegmod_kernel,
        out_shape=jax.ShapeDtypeStruct((rows, LANE_WIDTH), orig_dtype),
        grid=grid,
        in_specs=[pl.BlockSpec((block_rows, LANE_WIDTH), lambda i: (i, 0))],
        out_specs=pl.BlockSpec((block_rows, LANE_WIDTH), lambda i: (i, 0)),
        compiler_params=pltpu.CompilerParams(
            dimension_semantics=("parallel",),
        ),
    )(x2d)

    if padded:
        return out2d.reshape(-1)[:n].reshape(orig_shape)
    return out2d.reshape(orig_shape)


if __name__ == "__main__":
    key = jax.random.PRNGKey(0)
    # NCHW input, consistent with typical conv-activation usage.
    x = jax.random.normal(key, (2, 4, 16, 16), dtype=jnp.float32)

    out = expnegmod(x)
    jax.block_until_ready(out)

    # Sanity check against plain-JAX reference.
    ref = jnp.exp(-jnp.abs(x))
    assert out.shape == x.shape and out.dtype == x.dtype
    assert jnp.allclose(out, ref, atol=1e-6, rtol=1e-5)

    print("KERNEL_OK")
</pallas_src>

<mosaic_0001>
module attributes {stable_mosaic.version = 11 : i64} {
  func.func @_expnegmod_kernel(%arg0: i32, %arg1: memref<2x1024xf32, #tpu.memory_space<vmem>>, %arg2: memref<2x1024xf32, #tpu.memory_space<vmem>>) attributes {dimension_semantics = [#tpu.dimension_semantics<parallel>], iteration_bounds = array<i64: 1>, scalar_prefetch = 0 : i64, scratch_operands = 0 : i64, tpu.core_type = #tpu.core_type<tc>, window_params = [{transform_indices = @transform_0, window_bounds = array<i64: 2, 1024>}, {transform_indices = @transform_1, window_bounds = array<i64: 2, 1024>}]} {
    %c0 = arith.constant 0 : index
    %c0_0 = arith.constant 0 : index
    %0 = vector.load %arg1[%c0, %c0_0] : memref<2x1024xf32, #tpu.memory_space<vmem>>, vector<2x1024xf32>
    %1 = math.absf %0 : vector<2x1024xf32>
    %cst = arith.constant 0.000000e+00 : f32
    %2 = vector.broadcast %cst : f32 to vector<2x1024xf32>
    %3 = arith.subf %2, %1 : vector<2x1024xf32>
    %4 = math.exp %3 : vector<2x1024xf32>
    %c0_1 = arith.constant 0 : index
    %c0_2 = arith.constant 0 : index
    %5 = vector.load %arg2[%c0_1, %c0_2] : memref<2x1024xf32, #tpu.memory_space<vmem>>, vector<2x1024xf32>
    tpu.vector_store %arg2[%c0_1, %c0_2], %4 {strides = array<i32>} : memref<2x1024xf32, #tpu.memory_space<vmem>>, vector<2x1024xf32>,
    return
  }
  func.func @transform_0(%arg0: i32) -> (i32, i32) {
    %c0_i32 = arith.constant 0 : i32
    %c0_i32_0 = arith.constant 0 : i32
    return %arg0, %c0_i32 : i32, i32
  }
  func.func @transform_1(%arg0: i32) -> (i32, i32) {
    %c0_i32 = arith.constant 0 : i32
    %c0_i32_0 = arith.constant 0 : i32
    return %arg0, %c0_i32 : i32, i32
  }
}

</mosaic_0001>

<llo_original>
// kernel: tpu_custom_call.1
$region0: #{tpu_custom_call.1}
  #allocation0 [shape = 'u32[]', space=smem, size = 0x4, offset = 0x4, fixed_abs, tag = 'smem constant byte address 0x4 - core index']
  #allocation1 [shape = 'u32[144,128]{1,0:T(1,128)}', space=vmem, size = 0x12000, scoped, tag = 'internal scratch']
  %s0 = inlined_call_operand.hbm [shape: f32[2,1024], index: 0, kind: input, shape index: {}]
  %s1 = inlined_call_operand.hbm [shape: f32[2,1024], index: 1, kind: output, shape index: {}]
  %s2 = sld [smem:[#allocation0]]
  $region18: #{tpu_custom_call.1} parent=0
    _
  %s4 = ssub.s32 1, %s2
  %s5 = scalar_select 0, %s4, %s2
  $region1: #{tpu_custom_call.1} parent=0
    #allocation2 [shape = 'u8[8192]{0}', space=vmem, size = 0x2000, scoped, tag = 'input window, operand 0, single buffered']
    #allocation3 [shape = 's32[1]{0}', space=sflag, size = 0x4, scoped, tag = 'scoped memory for tpu_custom_call.1']
    #allocation4 [shape = 's32[1]{0}', space=sflag, size = 0x4, scoped, tag = 'scoped memory for tpu_custom_call.1']
    #allocation5 [shape = 'u8[8192]{0}', space=vmem, size = 0x2000, scoped, tag = 'output window, operand 0, single buffered']
    %6 = vsyncpa [#allocation3], 0
    %7 = vsyncpa [#allocation4], 0
    // Predicated region
    $region2: #{tpu_custom_call.1} parent=1 // pred_check
      _
    $region3: #{tpu_custom_call.1} parent=1 // pred_check_branch
      %9 = sbr.rel (0) target = $region5
    $region4: #{tpu_custom_call.1} parent=1 // pred_region
      %s11 = ssub.s32 256, 256
      %12 = vsyncadd [#allocation3], %s11
      %s14 = sshll.u32 [#allocation2], 4
      %s15 = int_to_ptr.vmem [resolvable:$true] %s14
      %17 = dma.hbm_to_vmem [thread:$0]  %s0, 256, %s15, [#allocation3]
    $region5: #{tpu_custom_call.1} parent=1 // pred_fallthru
      _
    // Predicated region
    $region6: #{tpu_custom_call.1} parent=1 // pred_check
      _
    $region7: #{tpu_custom_call.1} parent=1 // pred_check_branch
      %19 = sbr.rel (0) target = $region9
    $region8: #{tpu_custom_call.1} parent=1 // pred_region
      %20 = dma.done [#allocation3], 256
    $region9: #{tpu_custom_call.1} parent=1 // pred_fallthru
      _
    %v21 = vld [vmem:[#allocation2] sm:$0xff]
    %v22 = vld [vmem:[#allocation2 + $0x8] sm:$0xff]
    %v23 = vand.u32 2147483647, %v21
    %v24 = vand.u32 2147483647, %v22
    %v25 = vsub.f32 0.0, %v23
    %v26 = vsub.f32 0.0, %v24
    %v27 = vmul.f32 %v25, 1.442695
    %v28 = vpow.pop %v27
    %v29 = vmul.f32 %v26, 1.442695
    %v30 = vpow.pop %v29
    %31 = vst [vmem:[#allocation5] sm:$0xff] %v28
    %32 = vst [vmem:[#allocation5 + $0x8] sm:$0xff] %v30
    // Predicated region
    $region10: #{tpu_custom_call.1} parent=1 // pred_check
      _
    $region11: #{tpu_custom_call.1} parent=1 // pred_check_branch
      %34 = sbr.rel (0) target = $region13
    $region12: #{tpu_custom_call.1} parent=1 // pred_region
      %s36 = ssub.s32 256, 256
      %37 = vsyncadd [#allocation4], %s36
      %s39 = sshll.u32 [#allocation5], 4
      %s40 = int_to_ptr.vmem [resolvable:$true] %s39
      %42 = dma.vmem_to_hbm [thread:$0]  %s40, 256, %s1, [#allocation4]
    $region13: #{tpu_custom_call.1} parent=1 // pred_fallthru
      _
    // Predicated region
    $region14: #{tpu_custom_call.1} parent=1 // pred_check
      _
    $region15: #{tpu_custom_call.1} parent=1 // pred_check_branch
      %44 = sbr.rel (0) target = $region17
    $region16: #{tpu_custom_call.1} parent=1 // pred_region
      %45 = dma.done [#allocation4], 256
    $region17: #{tpu_custom_call.1} parent=1 // pred_fallthru
      _
    %46 = vsyncpa [#allocation3], 1
    %47 = vsyncpa [#allocation4], 1

</llo_original>
